<compile_context>
chip_gen: v5e
topology: v5e:2x2
jax: 0.10.0
libtpu: 0.0.40
codegen_flags: <defaults>
</compile_context>

<pallas_src>
import jax
import jax.numpy as jnp
from jax.experimental import pallas as pl
from jax.experimental.pallas import tpu as pltpu


# ---------------------------------------------------------------------------
# Parameter slab layout (all row ranges start AND span multiples of 8):
#   rows  0:32, cols 0:8   -> W1 (real 30x8)          ; col  8 -> b1 (real 30)
#   rows 32:48, cols 0:32  -> W2 (real 10x30)         ; col 32 -> b2 (real 10)
#   rows 48:64, col  0     -> w3 as a column (real 10); [48,1] -> b3 (scalar)
# Padded entries are zero, so padded activations (sigmoid(0)=0.5) are always
# multiplied by zero weights downstream and cannot contaminate the output.
# ---------------------------------------------------------------------------
_SLAB_SHAPE = (64, 48)


def pack_params(params):
    """Pack PyTorch-layout ([out, in]) weights + biases into one f32 VMEM slab."""
    slab = jnp.zeros(_SLAB_SHAPE, jnp.float32)
    slab = slab.at[0:30, 0:8].set(jnp.asarray(params["w1"], jnp.float32))
    slab = slab.at[0:30, 8].set(jnp.asarray(params["b1"], jnp.float32))
    slab = slab.at[32:42, 0:30].set(jnp.asarray(params["w2"], jnp.float32))
    slab = slab.at[32:42, 32].set(jnp.asarray(params["b2"], jnp.float32))
    slab = slab.at[48:58, 0].set(jnp.asarray(params["w3"], jnp.float32)[0, :])
    slab = slab.at[48, 1].set(jnp.asarray(params["b3"], jnp.float32)[0])
    return slab


def _sigmoid(z):
    # sigmoid(z) == 0.5 * tanh(0.5 * z) + 0.5  -> single EUP push per vreg.
    return 0.5 * jnp.tanh(0.5 * z) + 0.5


def _mlp_kernel(x_ref, p_ref, o_ref):
    x = x_ref[...]                        # (bt, 8)  batch-major block of the batch

    w1 = p_ref[0:32, 0:8]                 # (32, 8)   rows 30:32 zero
    b1 = p_ref[0:32, 8:9]                 # (32, 1)
    w2 = p_ref[32:48, 0:32]               # (16, 32)  rows 10:16 / cols 30:32 zero
    b2 = p_ref[32:48, 32:33]              # (16, 1)
    w3 = p_ref[48:64, 0:1]                # (16, 1)   rows 10:16 zero
    b3 = p_ref[48:49, 1:2]                # (1, 1)

    # Layer 1: feature-major on the MXU; the batch-major x block is consumed as a
    # transposed RHS (contract dim 1 of both operands) -> (32, bt), no wrapper
    # transpose and the relayout rides the otherwise-idle XLU slot.
    h1 = _sigmoid(
        jax.lax.dot_general(w1, x, (((1,), (1,)), ((), ())),
                            preferred_element_type=jnp.float32) + b1)         # (32, bt)
    h2 = _sigmoid(jnp.dot(w2, h1, preferred_element_type=jnp.float32) + b2)   # (16, bt)
    # Layer 3 (out_features=1): VPU multiply + XLU sublane reduce instead of an
    # M=1 MXU matmul.
    y = _sigmoid(jnp.sum(w3 * h2, axis=0, keepdims=True) + b3)                # (1, bt)

    o_ref[...] = y.astype(o_ref.dtype)    # lane-dense store: last dim = bt


def _round_up(n, m):
    return (n + m - 1) // m * m


def mlp_forward(x, params, *, block_b=8192):
    """x: (B, 8) float; params: PyTorch-layout dict (w: [out, in], b: [out])."""
    B = x.shape[0]
    assert x.shape[1] == 8

    # Batch tile: multiple of 128 (lane width).  Cap at half the rounded batch so
    # the "parallel" grid axis keeps >=2 steps (v7x megacore); block_b=8192 keeps
    # the lane-padded (bt,8) double-buffers (~8 MiB) inside every chip's default
    # scoped VMEM limit.
    block_b = max(128, (block_b // 128) * 128)
    b128 = _round_up(B, 128)
    half = _round_up((b128 + 1) // 2, 128)
    bt = max(128, min(block_b, half))
    b_pad = _round_up(B, bt)
    grid = (b_pad // bt,)

    x32 = x.astype(jnp.float32)
    if b_pad != B:
        x_in = jnp.pad(x32, ((0, b_pad - B), (0, 0)))   # single fused pad, only if needed
    else:
        x_in = x32

    slab = pack_params(params)            # (64, 48) f32, ~12 KiB, resident across steps

    out = pl.pallas_call(
        _mlp_kernel,
        out_shape=jax.ShapeDtypeStruct((1, b_pad), jnp.float32),
        grid_spec=pltpu.PrefetchScalarGridSpec(
            num_scalar_prefetch=0,
            grid=grid,
            in_specs=[
                pl.BlockSpec((bt, 8), lambda i: (i, 0)),       # stream x blocks (batch-major)
                pl.BlockSpec(_SLAB_SHAPE, lambda i: (0, 0)),   # params: resident in VMEM
            ],
            out_specs=pl.BlockSpec((1, bt), lambda i: (0, i)),  # lane-dense output
        ),
        compiler_params=pltpu.CompilerParams(
            dimension_semantics=("parallel",),  # megacore split of the batch on v7x
        ),
    )(x_in, slab)

    return out[0, :B].reshape(B, 1)


def init_params(key):
    """Deterministic init matching torch.nn.Linear default shapes ([out, in] weights)."""
    k1, k2, k3, k4, k5, k6 = jax.random.split(key, 6)

    def linear(kw, kb, fan_in, fan_out):
        bound = 1.0 / jnp.sqrt(fan_in)
        w = jax.random.uniform(kw, (fan_out, fan_in), jnp.float32, -bound, bound)
        b = jax.random.uniform(kb, (fan_out,), jnp.float32, -bound, bound)
        return w, b

    w1, b1 = linear(k1, k2, 8, 30)
    w2, b2 = linear(k3, k4, 30, 10)
    w3, b3 = linear(k5, k6, 10, 1)
    return {"w1": w1, "b1": b1, "w2": w2, "b2": b2, "w3": w3, "b3": b3}


def reference_forward(x, p):
    h1 = jax.nn.sigmoid(x @ p["w1"].T + p["b1"])
    h2 = jax.nn.sigmoid(h1 @ p["w2"].T + p["b2"])
    return jax.nn.sigmoid(h2 @ p["w3"].T + p["b3"])


if __name__ == "__main__":
    key = jax.random.PRNGKey(0)
    kx, kp = jax.random.split(key)
    batch = 16
    x = jax.random.normal(kx, (batch, 8), jnp.float32)
    params = init_params(kp)

    y = mlp_forward(x, params)
    jax.block_until_ready(y)

    y_ref = reference_forward(x, params)
    assert y.shape == (batch, 1)
    assert jnp.allclose(y, y_ref, atol=1e-5, rtol=1e-5), float(jnp.max(jnp.abs(y - y_ref)))
    print("KERNEL_OK")
</pallas_src>

<mosaic_0001>
module attributes {stable_mosaic.version = 11 : i64} {
  func.func @_mlp_kernel(%arg0: i32, %arg1: memref<128x8xf32, #tpu.memory_space<vmem>>, %arg2: memref<64x48xf32, #tpu.memory_space<vmem>>, %arg3: memref<1x128xf32, #tpu.memory_space<vmem>>) attributes {dimension_semantics = [#tpu.dimension_semantics<parallel>], iteration_bounds = array<i64: 1>, scalar_prefetch = 0 : i64, scratch_operands = 0 : i64, tpu.core_type = #tpu.core_type<tc>, window_params = [{transform_indices = @transform_0, window_bounds = array<i64: 128, 8>}, {pipeline_mode = #tpu.pipeline_mode<synchronous>, transform_indices = @transform_1, window_bounds = array<i64: 64, 48>}, {transform_indices = @transform_2, window_bounds = array<i64: 1, 128>}]} {
    %c0 = arith.constant 0 : index
    %c0_0 = arith.constant 0 : index
    %0 = vector.load %arg1[%c0, %c0_0] : memref<128x8xf32, #tpu.memory_space<vmem>>, vector<128x8xf32>
    %c0_1 = arith.constant 0 : index
    %c0_2 = arith.constant 0 : index
    %1 = vector.load %arg2[%c0_1, %c0_2] : memref<64x48xf32, #tpu.memory_space<vmem>>, vector<32x8xf32>
    %c0_3 = arith.constant 0 : index
    %c8 = arith.constant 8 : index
    %2 = vector.load %arg2[%c0_3, %c8] : memref<64x48xf32, #tpu.memory_space<vmem>>, vector<32x1xf32>
    %c32 = arith.constant 32 : index
    %c0_4 = arith.constant 0 : index
    %3 = vector.load %arg2[%c32, %c0_4] : memref<64x48xf32, #tpu.memory_space<vmem>>, vector<16x32xf32>
    %c32_5 = arith.constant 32 : index
    %c32_6 = arith.constant 32 : index
    %4 = vector.load %arg2[%c32_5, %c32_6] : memref<64x48xf32, #tpu.memory_space<vmem>>, vector<16x1xf32>
    %c48 = arith.constant 48 : index
    %c0_7 = arith.constant 0 : index
    %5 = vector.load %arg2[%c48, %c0_7] : memref<64x48xf32, #tpu.memory_space<vmem>>, vector<16x1xf32>
    %c48_8 = arith.constant 48 : index
    %c1 = arith.constant 1 : index
    %6 = vector.load %arg2[%c48_8, %c1] : memref<64x48xf32, #tpu.memory_space<vmem>>, vector<1x1xf32>
    %cst = arith.constant dense<0.000000e+00> : vector<32x128xf32>
    %7 = tpu.matmul %1, %0, %cst {dimension_numbers = #tpu.dot_dimension_numbers<[1], [1], [0], [0], [0, 0, 1, 0], [], []>} : vector<32x8xf32>, vector<128x8xf32>, vector<32x128xf32> -> vector<32x128xf32>
    %8 = vector.broadcast %2 : vector<32x1xf32> to vector<32x128xf32>
    %9 = arith.addf %7, %8 : vector<32x128xf32>
    %cst_9 = arith.constant 5.000000e-01 : f32
    %10 = vector.broadcast %cst_9 : f32 to vector<32x128xf32>
    %11 = arith.mulf %10, %9 : vector<32x128xf32>
    %12 = math.tanh %11 : vector<32x128xf32>
    %cst_10 = arith.constant 5.000000e-01 : f32
    %13 = vector.broadcast %cst_10 : f32 to vector<32x128xf32>
    %14 = arith.mulf %13, %12 : vector<32x128xf32>
    %cst_11 = arith.constant 5.000000e-01 : f32
    %15 = vector.broadcast %cst_11 : f32 to vector<32x128xf32>
    %16 = arith.addf %14, %15 : vector<32x128xf32>
    %cst_12 = arith.constant dense<0.000000e+00> : vector<16x128xf32>
    %17 = tpu.matmul %3, %16, %cst_12 {dimension_numbers = #tpu.dot_dimension_numbers<[1], [0], [0], [1], [0, 0, 1, 1], [], []>} : vector<16x32xf32>, vector<32x128xf32>, vector<16x128xf32> -> vector<16x128xf32>
    %18 = vector.broadcast %4 : vector<16x1xf32> to vector<16x128xf32>
    %19 = arith.addf %17, %18 : vector<16x128xf32>
    %cst_13 = arith.constant 5.000000e-01 : f32
    %20 = vector.broadcast %cst_13 : f32 to vector<16x128xf32>
    %21 = arith.mulf %20, %19 : vector<16x128xf32>
    %22 = math.tanh %21 : vector<16x128xf32>
    %cst_14 = arith.constant 5.000000e-01 : f32
    %23 = vector.broadcast %cst_14 : f32 to vector<16x128xf32>
    %24 = arith.mulf %23, %22 : vector<16x128xf32>
    %cst_15 = arith.constant 5.000000e-01 : f32
    %25 = vector.broadcast %cst_15 : f32 to vector<16x128xf32>
    %26 = arith.addf %24, %25 : vector<16x128xf32>
    %27 = vector.broadcast %5 : vector<16x1xf32> to vector<16x128xf32>
    %28 = arith.mulf %27, %26 : vector<16x128xf32>
    %cst_16 = arith.constant dense<0.000000e+00> : vector<128xf32>
    %29 = vector.multi_reduction <add>, %28, %cst_16 [0] : vector<16x128xf32> to vector<128xf32>
    %30 = vector.shape_cast %29 : vector<128xf32> to vector<1x128xf32>
    %31 = vector.broadcast %6 : vector<1x1xf32> to vector<1x128xf32>
    %32 = arith.addf %30, %31 : vector<1x128xf32>
    %cst_17 = arith.constant 5.000000e-01 : f32
    %33 = vector.broadcast %cst_17 : f32 to vector<1x128xf32>
    %34 = arith.mulf %33, %32 : vector<1x128xf32>
    %35 = math.tanh %34 : vector<1x128xf32>
    %cst_18 = arith.constant 5.000000e-01 : f32
    %36 = vector.broadcast %cst_18 : f32 to vector<1x128xf32>
    %37 = arith.mulf %36, %35 : vector<1x128xf32>
    %cst_19 = arith.constant 5.000000e-01 : f32
    %38 = vector.broadcast %cst_19 : f32 to vector<1x128xf32>
    %39 = arith.addf %37, %38 : vector<1x128xf32>
    %c0_20 = arith.constant 0 : index
    %c0_21 = arith.constant 0 : index
    %40 = vector.load %arg3[%c0_20, %c0_21] : memref<1x128xf32, #tpu.memory_space<vmem>>, vector<1x128xf32>
    tpu.vector_store %arg3[%c0_20, %c0_21], %39 {strides = array<i32>} : memref<1x128xf32, #tpu.memory_space<vmem>>, vector<1x128xf32>,
    return
  }
  func.func @transform_0(%arg0: i32) -> (i32, i32) {
    %c0_i32 = arith.constant 0 : i32
    %c0_i32_0 = arith.constant 0 : i32
    return %arg0, %c0_i32 : i32, i32
  }
  func.func @transform_1(%arg0: i32) -> (i32, i32) {
    %c0_i32 = arith.constant 0 : i32
    %c0_i32_0 = arith.constant 0 : i32
    %c0_i32_1 = arith.constant 0 : i32
    return %c0_i32, %c0_i32_0 : i32, i32
  }
  func.func @transform_2(%arg0: i32) -> (i32, i32) {
    %c0_i32 = arith.constant 0 : i32
    %c0_i32_0 = arith.constant 0 : i32
    return %c0_i32, %arg0 : i32, i32
  }
}

</mosaic_0001>

<llo_original>
// kernel: tpu_custom_call.1
$region0: #{tpu_custom_call.1}
  #allocation0 [shape = 'u32[]', space=smem, size = 0x4, offset = 0x4, fixed_abs, tag = 'smem constant byte address 0x4 - core index']
  #allocation1 [shape = 'u32[72,128]{1,0:T(1,128)}', space=vmem, size = 0x9000, scoped, tag = 'internal scratch']
  %s0 = inlined_call_operand.vmem [shape: f32[128,8], index: 0, kind: input, shape index: {}]
  %s1 = inlined_call_operand.vmem [shape: f32[64,48], index: 1, kind: input, shape index: {}]
  %s2 = inlined_call_operand.hbm [shape: f32[1,128], index: 2, kind: output, shape index: {}]
  %s3 = sld [smem:[#allocation0]]
  $region18: #{tpu_custom_call.1} parent=0
    _
  %s5 = ssub.s32 1, %s3
  %s6 = scalar_select 0, %s5, %s3
  $region1: #{tpu_custom_call.1} parent=0
    #allocation2 [shape = 'u8[512]{0}', space=vmem, size = 0x400, scoped, tag = 'output window, operand 0, single buffered']
    #allocation3 [shape = 's32[1]{0}', space=sflag, size = 0x4, scoped, tag = 'scoped memory for tpu_custom_call.1']
    %7 = vsyncpa [#allocation3], 0
    // Predicated region
    $region2: #{tpu_custom_call.1} parent=1 // pred_check
      _
    $region3: #{tpu_custom_call.1} parent=1 // pred_check_branch
      %9 = sbr.rel (0) target = $region5
    $region4: #{tpu_custom_call.1} parent=1 // pred_region
      _
    $region5: #{tpu_custom_call.1} parent=1 // pred_fallthru
      _
    // Predicated region
    $region6: #{tpu_custom_call.1} parent=1 // pred_check
      _
    $region7: #{tpu_custom_call.1} parent=1 // pred_check_branch
      %11 = sbr.rel (0) target = $region9
    $region8: #{tpu_custom_call.1} parent=1 // pred_region
      _
    $region9: #{tpu_custom_call.1} parent=1 // pred_fallthru
      _
    %v12 = vld [vmem:[%s0] sm:$0xff]
    %v13 = vld [vmem:[%s0 + $0x8] sm:$0xff]
    %v14 = vld [vmem:[%s0 + $0x10] sm:$0xff]
    %v15 = vld [vmem:[%s0 + $0x18] sm:$0xff]
    %v16 = vld [vmem:[%s0 + $0x20] sm:$0xff]
    %v17 = vld [vmem:[%s0 + $0x28] sm:$0xff]
    %v18 = vld [vmem:[%s0 + $0x30] sm:$0xff]
    %v19 = vld [vmem:[%s0 + $0x38] sm:$0xff]
    %v20 = vld [vmem:[%s0 + $0x40] sm:$0xff]
    %v21 = vld [vmem:[%s0 + $0x48] sm:$0xff]
    %v22 = vld [vmem:[%s0 + $0x50] sm:$0xff]
    %v23 = vld [vmem:[%s0 + $0x58] sm:$0xff]
    %v24 = vld [vmem:[%s0 + $0x60] sm:$0xff]
    %v25 = vld [vmem:[%s0 + $0x68] sm:$0xff]
    %v26 = vld [vmem:[%s0 + $0x70] sm:$0xff]
    %v27 = vld [vmem:[%s0 + $0x78] sm:$0xff]
    %v28 = vld [vmem:[%s1] sm:$0xff]
    %v29 = vld [vmem:[%s1 + $0x8] sm:$0xff]
    %v30 = vld [vmem:[%s1 + $0x10] sm:$0xff]
    %v31 = vld [vmem:[%s1 + $0x18] sm:$0xff]
    %v32 = vld [vmem:[%s1 + $0x20] sm:$0xff]
    %v33 = vld [vmem:[%s1 + $0x28] sm:$0xff]
    %v34 = vld [vmem:[%s1 + $0x30] sm:$0xff]
    %v35 = vld [vmem:[%s1 + $0x38] sm:$0xff]
    %v36 = vld [vmem:[%s1 + $0x30] sm:$0x1]
    %38 = vset.pattern.permute.xlu0 8
    %39 = vperm.xlu0 %38, %v28
    %v40 = vpop.permute.xlu0 %39
    %43 = vset.pattern.permute.xlu0 8
    %44 = vperm.xlu0 %43, %v29
    %v45 = vpop.permute.xlu0 %44
    %48 = vset.pattern.permute.xlu0 8
    %49 = vperm.xlu0 %48, %v30
    %v50 = vpop.permute.xlu0 %49
    %53 = vset.pattern.permute.xlu0 8
    %54 = vperm.xlu0 %53, %v31
    %v55 = vpop.permute.xlu0 %54
    %vm57 = vcmask 64512
    %v58 = vsel %vm57, %v28, 0
    %v60 = vsel %vm57, %v29, 0
    %v62 = vsel %vm57, %v30, 0
    %v64 = vsel %vm57, %v31, 0
    %v67 = vsel %vm57, %v12, 0
    %v70 = vsel %vm57, %v13, 0
    %v73 = vsel %vm57, %v14, 0
    %v76 = vsel %vm57, %v15, 0
    %v79 = vsel %vm57, %v16, 0
    %v82 = vsel %vm57, %v17, 0
    %v85 = vsel %vm57, %v18, 0
    %v88 = vsel %vm57, %v19, 0
    %v91 = vsel %vm57, %v20, 0
    %v94 = vsel %vm57, %v21, 0
    %v97 = vsel %vm57, %v22, 0
    %v100 = vsel %vm57, %v23, 0
    %v103 = vsel %vm57, %v24, 0
    %v106 = vsel %vm57, %v25, 0
    %v109 = vsel %vm57, %v26, 0
    %v112 = vsel %vm57, %v27, 0
    %114 = vmatpush.xpose.msra.mxu0 %v112
    %115 = vmatpush.xpose.msra.mxu0 %v109
    %116 = vmatpush.xpose.msra.mxu0 %v106
    %117 = vmatpush.xpose.msra.mxu0 %v103
    %118 = vmatpush.xpose.msra.mxu0 %v100
    %119 = vmatpush.xpose.msra.mxu0 %v97
    %120 = vmatpush.xpose.msra.mxu0 %v94
    %121 = vmatpush.xpose.msra.mxu0 %v91
    %122 = vmatpush.xpose.msra.mxu0 %v88
    %123 = vmatpush.xpose.msra.mxu0 %v85
    %124 = vmatpush.xpose.msra.mxu0 %v82
    %125 = vmatpush.xpose.msra.mxu0 %v79
    %126 = vmatpush.xpose.msra.mxu0 %v76
    %127 = vmatpush.xpose.msra.mxu0 %v73
    %128 = vmatpush.xpose.msra.mxu0 %v70
    %129 = vmatpush.xpose.msra.mxu0 %v67
    %130 = vmatmul.f32.gmra.mxu0 %v58
    %v131 = vpop.f32.mrf.mxu0
    %v132 = vadd.f32 %v40, %v131
    %133 = vmatmul.f32.gmra.mxu0 %v60
    %v134 = vpop.f32.mrf.mxu0
    %v135 = vadd.f32 %v45, %v134
    %136 = vmatmul.f32.gmra.mxu0 %v62
    %v137 = vpop.f32.mrf.mxu0
    %v138 = vadd.f32 %v50, %v137
    %139 = vmatmul.f32.gmra.mxu0 %v64
    %v140 = vpop.f32.mrf.mxu0
    %v141 = vadd.f32 %v55, %v140
    %142 = vdwg.mxu0
    %v143 = vmul.f32 %v132, 0.5
    %v144 = vmul.f32 %v135, 0.5
    %v145 = vmul.f32 %v138, 0.5
    %v146 = vmul.f32 %v141, 0.5
    %v147 = vtanh.pop %v143
    %v148 = vtanh.pop %v144
    %v149 = vtanh.pop %v145
    %v150 = vtanh.pop %v146
    %v151 = vmul.f32 %v147, 0.5
    %v152 = vmul.f32 %v148, 0.5
    %v153 = vmul.f32 %v149, 0.5
    %v154 = vmul.f32 %v150, 0.5
    %v155 = vadd.f32 %v151, 0.5
    %v156 = vadd.f32 %v152, 0.5
    %v157 = vadd.f32 %v153, 0.5
    %v158 = vadd.f32 %v154, 0.5
    %160 = vset.pattern.permute.xlu0 32
    %161 = vperm.xlu0 %160, %v32
    %v162 = vpop.permute.xlu0 %161
    %165 = vset.pattern.permute.xlu0 32
    %166 = vperm.xlu0 %165, %v33
    %v167 = vpop.permute.xlu0 %166
    %vm169 = vcmask 261120
    %v170 = vsel %vm169, %v32, 0
    %v172 = vsel %vm169, %v33, 0
    %174 = vmatpush.msra.mxu0 0.0
    %175 = vmatpush.msra.mxu0 0.0
    %176 = vmatpush.msra.mxu0 0.0
    %177 = vmatpush.msra.mxu0 0.0
    %178 = vmatpush.msra.mxu0 0.0
    %179 = vmatpush.msra.mxu0 0.0
    %180 = vmatpush.msra.mxu0 0.0
    %181 = vmatpush.msra.mxu0 0.0
    %182 = vmatpush.msra.mxu0 0.0
    %183 = vmatpush.msra.mxu0 0.0
    %184 = vmatpush.msra.mxu0 0.0
    %185 = vmatpush.msra.mxu0 0.0
    %186 = vmatpush.msra.mxu0 %v158
    %187 = vmatpush.msra.mxu0 %v157
    %188 = vmatpush.msra.mxu0 %v156
    %189 = vmatpush.msra.mxu0 %v155
    %190 = vmatmul.f32.gmra.mxu0 %v170
    %v191 = vpop.f32.mrf.mxu0
    %v192 = vadd.f32 %v162, %v191
    %193 = vmatmul.f32.gmra.mxu0 %v172
    %v194 = vpop.f32.mrf.mxu0
    %v195 = vadd.f32 %v167, %v194
    %196 = vdwg.mxu0
    %v197 = vmul.f32 %v192, 0.5
    %v198 = vmul.f32 %v195, 0.5
    %v199 = vtanh.pop %v197
    %v200 = vtanh.pop %v198
    %v201 = vmul.f32 %v199, 0.5
    %v202 = vmul.f32 %v200, 0.5
    %v203 = vadd.f32 %v201, 0.5
    %v204 = vadd.f32 %v202, 0.5
    %206 = vset.pattern.permute.xlu0 0
    %207 = vperm.xlu0 %206, %v34
    %v208 = vpop.permute.xlu0 %207
    %211 = vset.pattern.permute.xlu0 0
    %212 = vperm.xlu0 %211, %v35
    %v213 = vpop.permute.xlu0 %212
    %v215 = vmul.f32 %v208, %v203
    %v216 = vmul.f32 %v213, %v204
    %v217 = vadd.f32 %v215, %v216
    %v218 = vrot.slane %v217, 4
    %v219 = vadd.f32 %v217, %v218
    %v220 = vrot.slane %v219, 2
    %v221 = vadd.f32 %v219, %v220
    %v222 = vrot.slane %v221, 1
    %v223 = vadd.f32 %v221, %v222
    %225 = vset.pattern.permute.xlu0 1
    %226 = vperm.xlu0 %225, %v36
    %v227 = vpop.permute.xlu0 %226
    %v229 = vadd.f32 %v223, %v227
    %v230 = vmul.f32 %v229, 0.5
    %v231 = vtanh.pop %v230
    %v232 = vmul.f32 %v231, 0.5
    %v233 = vadd.f32 %v232, 0.5
    %234 = vst [vmem:[#allocation2] sm:$0x1] %v233
    // Predicated region
    $region10: #{tpu_custom_call.1} parent=1 // pred_check
      _
    $region11: #{tpu_custom_call.1} parent=1 // pred_check_branch
      %236 = sbr.rel (0) target = $region13
    $region12: #{tpu_custom_call.1} parent=1 // pred_region
      %238 = vsyncadd [#allocation3], 0
      %s240 = sshll.u32 [#allocation2], 4
      %s241 = int_to_ptr.vmem [resolvable:$true] %s240
      %s242 = sshll.u32 %s2, 4
      %s243 = int_to_ptr.hbm [resolvable:$true] %s242
      %245 = dma.vmem_to_hbm [thread:$0]  %s241, 16, %s243, [#allocation3]
    $region13: #{tpu_custom_call.1} parent=1 // pred_fallthru
      _
    // Predicated region
    $region14: #{tpu_custom_call.1} parent=1 // pred_check
      _
    $region15: #{tpu_custom_call.1} parent=1 // pred_check_branch
      %247 = sbr.rel (0) target = $region17
    $region16: #{tpu_custom_call.1} parent=1 // pred_region
      %249 = dma.done [#allocation3], 16
    $region17: #{tpu_custom_call.1} parent=1 // pred_fallthru
      _
    %250 = vsyncpa [#allocation3], 1

</llo_original>
